<compile_context>
chip_gen: v7x
topology: tpu7x:2x2x1
jax: 0.10.0
libtpu: 0.0.40
codegen_flags: <defaults>
</compile_context>

<pallas_src>
import functools
import math

import jax
import jax.numpy as jnp
from jax.experimental import pallas as pl
from jax.experimental.pallas import tpu as pltpu


def _rope_kernel(cos_ref, sin_hi_ref, sin_lo_ref, q_ref, k_ref, qo_ref, ko_ref,
                 *, d_half, use_xlu_roll, compute_dtype):
    """Apply out = x*cos + rotate_half(x)*sin on a (rows, seq_tile*D) flattened block."""
    cols = q_ref.shape[-1]
    cos = cos_ref[...]        # (1, cols) -- broadcast over rows
    sin_hi = sin_hi_ref[...]  # (1, cols) -- +sin where d >= D/2, zero elsewhere
    sin_lo = sin_lo_ref[...]  # (1, cols) -- -sin where d <  D/2, zero elsewhere

    def _roll(x, shift):
        shift = shift % cols              # static, non-negative
        if use_xlu_roll:
            return pltpu.roll(x, shift=shift, axis=1)   # XLU lane rotation
        return jnp.roll(x, shift, axis=1)                # fallback for non-128-multiple widths

    def apply(x_ref, o_ref):
        x = x_ref[...].astype(compute_dtype)
        # rotate_half partners sit +/- d_half away along the flattened lane axis.  Entries that
        # would wrap across a row/block boundary are multiplied by the zeros baked into
        # sin_hi / sin_lo, so plain rotations are safe.
        rot_hi = _roll(x, d_half)          # x[.., f - d_half]  (used on the d >= D/2 half)
        rot_lo = _roll(x, cols - d_half)   # x[.., f + d_half]  (used on the d <  D/2 half)
        o_ref[...] = (x * cos + rot_hi * sin_hi + rot_lo * sin_lo).astype(o_ref.dtype)

    apply(q_ref, qo_ref)
    apply(k_ref, ko_ref)


@functools.lru_cache(maxsize=32)
def _rope_tables(seq_len, dim, base, distance_scale):
    """cos / sign-folded sin tables, flattened to (1, S*D); cached across calls."""
    d_half = dim // 2
    inv_freq = 1.0 / base ** (jnp.arange(0, dim, 2, dtype=jnp.float32) / dim)   # (D/2,)
    t = jnp.arange(seq_len, dtype=jnp.float32) * distance_scale                 # (S,)
    freqs = jnp.outer(t, inv_freq)                                              # (S, D/2)
    emb = jnp.concatenate([freqs, freqs], axis=-1)                              # (S, D)
    cos = jnp.cos(emb)
    sin = jnp.sin(emb)
    zeros = jnp.zeros((seq_len, d_half), jnp.float32)
    sin_hi = jnp.concatenate([zeros, sin[:, d_half:]], axis=-1)                 # +sin on d >= D/2
    sin_lo = jnp.concatenate([-sin[:, :d_half], zeros], axis=-1)                # -sin on d <  D/2
    sd = seq_len * dim
    return cos.reshape(1, sd), sin_hi.reshape(1, sd), sin_lo.reshape(1, sd)


def _choose_tiles(bh, s, d, itemsize, *, block_budget_bytes=2 << 20, min_split_bytes=1 << 20):
    """Pick (rows_per_block, seq_rows_per_block) for the flattened (B*H, S*D) layout.

    Constraints: the block's last dim (ts*d) should be lane-dense (multiple of 128) unless it
    spans the whole sequence; the second-minor dim (tb) must be a multiple of 8 unless it equals
    B*H.  Grids use cdiv, so tb/ts need not divide B*H/S (edge blocks are partial).  Blocks are
    sized toward ~block_budget_bytes (safe for v7x's 64 MiB VMEM with 4 double-buffered streams),
    and on non-trivial problems at least 2 grid blocks are produced for v7x's 2 TensorCores.
    """
    lane = 128
    min_ts = lane // math.gcd(d, lane)             # smallest lane-dense seq tile

    def lane_dense(c):
        return (c * d) % lane == 0

    # --- sequence rows per block ---
    if s * d * itemsize <= block_budget_bytes:
        ts = s
    else:
        ts = None
        for c in range(s, 0, -1):
            if lane_dense(c) and c * d * itemsize <= block_budget_bytes:
                ts = c
                break
        if ts is None:                             # budget is advisory; keep stores lane-dense
            ts = min(min_ts, s)

    # --- flattened batch*head rows per block ---
    row_bytes = ts * d * itemsize
    if bh * row_bytes <= block_budget_bytes:
        tb = bh
    else:
        tb = max(8, (block_budget_bytes // row_bytes) // 8 * 8)
        tb = min(tb, bh)                           # if bh < 8 this is the full dim (legal)

    # --- guarantee >=2 blocks on non-trivial problems so both v7x TensorCores get work ---
    total_bytes = bh * s * d * itemsize
    if pl.cdiv(bh, tb) * pl.cdiv(s, ts) == 1 and total_bytes > min_split_bytes:
        if bh > 8:
            half_rows = (((bh + 1) // 2) + 7) // 8 * 8
            tb = min(tb, max(8, half_rows))
        else:
            for c in range((s + 1) // 2, 0, -1):
                if lane_dense(c) and c < s:
                    ts = c
                    break
    return tb, ts


def rotary_embedding_esm(q, k, *, base=10000.0, distance_scale=1.0,
                         compute_dtype=jnp.float32):
    """q, k: [B, H, S, D]. Returns (q_rot, k_rot) with the same shapes/dtypes.

    Pass bf16 q/k to halve HBM traffic (the op is memory-bound); compute_dtype=jnp.bfloat16
    additionally keeps the in-kernel math in bf16 (recommended only on v6e/v7x).
    """
    B, H, S, D = q.shape
    assert k.shape == q.shape, "kernel assumes q and k share [B, H, S, D]"
    assert D % 2 == 0, "head dim must be even for rotate_half"
    d_half = D // 2

    cos_f, sin_hi_f, sin_lo_f = _rope_tables(S, D, float(base), float(distance_scale))
    if cos_f.dtype != compute_dtype:
        cos_f = cos_f.astype(compute_dtype)
        sin_hi_f = sin_hi_f.astype(compute_dtype)
        sin_lo_f = sin_lo_f.astype(compute_dtype)

    BH, SD = B * H, S * D
    qf = q.reshape(BH, SD)          # free reshapes: contiguous, lane-dense last dim
    kf = k.reshape(BH, SD)

    q_item = jnp.dtype(q.dtype).itemsize
    k_item = jnp.dtype(k.dtype).itemsize
    tab_item = jnp.dtype(compute_dtype).itemsize
    tb, ts = _choose_tiles(BH, S, D, max(q_item, k_item))
    tcols = ts * D
    # seq OUTER, rows INNER: the table block index only depends on the outer axis, so it stays
    # constant across every inner step and Pallas skips its re-DMA.
    grid = (pl.cdiv(S, ts), pl.cdiv(BH, tb))

    row_spec = pl.BlockSpec((tb, tcols), lambda j, i: (i, j))
    tab_spec = pl.BlockSpec((1, tcols), lambda j, i: (0, j))   # invariant across the inner axis

    # 3 muls + 2 adds per element per tensor; pure streaming traffic for q, k and both outputs.
    cost = pl.CostEstimate(
        flops=10 * BH * SD,
        transcendentals=0,
        bytes_accessed=2 * BH * SD * (q_item + k_item) + 3 * SD * tab_item,
    )

    kernel = functools.partial(
        _rope_kernel,
        d_half=d_half,
        use_xlu_roll=(tcols % 128 == 0),
        compute_dtype=compute_dtype,
    )

    qo, ko = pl.pallas_call(
        kernel,
        out_shape=(
            jax.ShapeDtypeStruct((BH, SD), q.dtype),
            jax.ShapeDtypeStruct((BH, SD), k.dtype),
        ),
        grid_spec=pltpu.PrefetchScalarGridSpec(
            num_scalar_prefetch=0,
            grid=grid,
            in_specs=[tab_spec, tab_spec, tab_spec, row_spec, row_spec],
            out_specs=[row_spec, row_spec],
        ),
        compiler_params=pltpu.CompilerParams(
            dimension_semantics=("parallel", "parallel"),
            vmem_limit_bytes=32 * 1024 * 1024,   # fits v7x's 64 MiB VMEM with ample headroom
        ),
        cost_estimate=cost,
    )(cos_f, sin_hi_f, sin_lo_f, qf, kf)

    return qo.reshape(B, H, S, D), ko.reshape(B, H, S, D)


# ---------------- pure-JAX reference (mirrors the PyTorch module) ----------------
def _rotate_half_ref(x):
    d = x.shape[-1] // 2
    x1, x2 = x[..., :d], x[..., d:]
    return jnp.concatenate([-x2, x1], axis=-1)


def _rope_ref(q, k, base=10000.0, distance_scale=1.0):
    B, H, S, D = k.shape
    inv_freq = 1.0 / base ** (jnp.arange(0, D, 2, dtype=jnp.float32) / D)
    t = jnp.arange(S, dtype=jnp.float32) * distance_scale
    freqs = jnp.outer(t, inv_freq)
    emb = jnp.concatenate([freqs, freqs], axis=-1)
    cos = jnp.cos(emb)[None, None, :, :]
    sin = jnp.sin(emb)[None, None, :, :]
    return q * cos + _rotate_half_ref(q) * sin, k * cos + _rotate_half_ref(k) * sin


if __name__ == "__main__":
    key = jax.random.PRNGKey(0)
    kq, kk = jax.random.split(key)
    B, H, S, D = 2, 4, 16, 32
    q = jax.random.normal(kq, (B, H, S, D), dtype=jnp.float32)
    k = jax.random.normal(kk, (B, H, S, D), dtype=jnp.float32)

    q_out, k_out = rotary_embedding_esm(q, k)
    jax.block_until_ready((q_out, k_out))

    q_expect, k_expect = _rope_ref(q, k)
    assert q_out.shape == (B, H, S, D) and k_out.shape == (B, H, S, D)
    assert jnp.allclose(q_out, q_expect, atol=1e-5, rtol=1e-5)
    assert jnp.allclose(k_out, k_expect, atol=1e-5, rtol=1e-5)

    # bf16 I/O path (halves HBM traffic on this memory-bound op); math stays f32 in-kernel.
    q16, k16 = q.astype(jnp.bfloat16), k.astype(jnp.bfloat16)
    q16_out, k16_out = rotary_embedding_esm(q16, k16)
    jax.block_until_ready((q16_out, k16_out))
    assert q16_out.dtype == jnp.bfloat16 and k16_out.dtype == jnp.bfloat16
    assert jnp.allclose(q16_out.astype(jnp.float32), q_expect, atol=1e-1, rtol=1e-1)
    assert jnp.allclose(k16_out.astype(jnp.float32), k_expect, atol=1e-1, rtol=1e-1)

    print("KERNEL_OK")
</pallas_src>

<mosaic_0001>
module attributes {stable_mosaic.version = 11 : i64} {
  func.func @_rope_kernel(%arg0: i32, %arg1: i32, %arg2: memref<1x512xf32, #tpu.memory_space<vmem>>, %arg3: memref<1x512xf32, #tpu.memory_space<vmem>>, %arg4: memref<1x512xf32, #tpu.memory_space<vmem>>, %arg5: memref<8x512xf32, #tpu.memory_space<vmem>>, %arg6: memref<8x512xf32, #tpu.memory_space<vmem>>, %arg7: memref<8x512xf32, #tpu.memory_space<vmem>>, %arg8: memref<8x512xf32, #tpu.memory_space<vmem>>) attributes {dimension_semantics = [#tpu.dimension_semantics<parallel>, #tpu.dimension_semantics<parallel>], iteration_bounds = array<i64: 1, 1>, scalar_prefetch = 0 : i64, scratch_operands = 0 : i64, tpu.core_type = #tpu.core_type<tc>, window_params = [{transform_indices = @transform_0, window_bounds = array<i64: 1, 512>}, {transform_indices = @transform_1, window_bounds = array<i64: 1, 512>}, {transform_indices = @transform_2, window_bounds = array<i64: 1, 512>}, {transform_indices = @transform_3, window_bounds = array<i64: 8, 512>}, {transform_indices = @transform_4, window_bounds = array<i64: 8, 512>}, {transform_indices = @transform_5, window_bounds = array<i64: 8, 512>}, {transform_indices = @transform_6, window_bounds = array<i64: 8, 512>}]} {
    %c0 = arith.constant 0 : index
    %c0_0 = arith.constant 0 : index
    %0 = vector.load %arg2[%c0, %c0_0] : memref<1x512xf32, #tpu.memory_space<vmem>>, vector<1x512xf32>
    %c0_1 = arith.constant 0 : index
    %c0_2 = arith.constant 0 : index
    %1 = vector.load %arg3[%c0_1, %c0_2] : memref<1x512xf32, #tpu.memory_space<vmem>>, vector<1x512xf32>
    %c0_3 = arith.constant 0 : index
    %c0_4 = arith.constant 0 : index
    %2 = vector.load %arg4[%c0_3, %c0_4] : memref<1x512xf32, #tpu.memory_space<vmem>>, vector<1x512xf32>
    %c0_5 = arith.constant 0 : index
    %c0_6 = arith.constant 0 : index
    %3 = vector.load %arg5[%c0_5, %c0_6] : memref<8x512xf32, #tpu.memory_space<vmem>>, vector<8x512xf32>
    %c16_i32 = arith.constant 16 : i32
    %4 = tpu.dynamic_rotate %3 by %c16_i32 dim 1 : vector<8x512xf32>, i32 -> vector<8x512xf32>
    %c496_i32 = arith.constant 496 : i32
    %5 = tpu.dynamic_rotate %3 by %c496_i32 dim 1 : vector<8x512xf32>, i32 -> vector<8x512xf32>
    %6 = vector.broadcast %0 : vector<1x512xf32> to vector<8x512xf32>
    %7 = arith.mulf %3, %6 : vector<8x512xf32>
    %8 = vector.broadcast %1 : vector<1x512xf32> to vector<8x512xf32>
    %9 = arith.mulf %4, %8 : vector<8x512xf32>
    %10 = arith.addf %7, %9 : vector<8x512xf32>
    %11 = vector.broadcast %2 : vector<1x512xf32> to vector<8x512xf32>
    %12 = arith.mulf %5, %11 : vector<8x512xf32>
    %13 = arith.addf %10, %12 : vector<8x512xf32>
    %c0_7 = arith.constant 0 : index
    %c0_8 = arith.constant 0 : index
    %14 = vector.load %arg7[%c0_7, %c0_8] : memref<8x512xf32, #tpu.memory_space<vmem>>, vector<8x512xf32>
    tpu.vector_store %arg7[%c0_7, %c0_8], %13 {strides = array<i32>} : memref<8x512xf32, #tpu.memory_space<vmem>>, vector<8x512xf32>,
    %c0_9 = arith.constant 0 : index
    %c0_10 = arith.constant 0 : index
    %15 = vector.load %arg6[%c0_9, %c0_10] : memref<8x512xf32, #tpu.memory_space<vmem>>, vector<8x512xf32>
    %c16_i32_11 = arith.constant 16 : i32
    %16 = tpu.dynamic_rotate %15 by %c16_i32_11 dim 1 : vector<8x512xf32>, i32 -> vector<8x512xf32>
    %c496_i32_12 = arith.constant 496 : i32
    %17 = tpu.dynamic_rotate %15 by %c496_i32_12 dim 1 : vector<8x512xf32>, i32 -> vector<8x512xf32>
    %18 = vector.broadcast %0 : vector<1x512xf32> to vector<8x512xf32>
    %19 = arith.mulf %15, %18 : vector<8x512xf32>
    %20 = vector.broadcast %1 : vector<1x512xf32> to vector<8x512xf32>
    %21 = arith.mulf %16, %20 : vector<8x512xf32>
    %22 = arith.addf %19, %21 : vector<8x512xf32>
    %23 = vector.broadcast %2 : vector<1x512xf32> to vector<8x512xf32>
    %24 = arith.mulf %17, %23 : vector<8x512xf32>
    %25 = arith.addf %22, %24 : vector<8x512xf32>
    %c0_13 = arith.constant 0 : index
    %c0_14 = arith.constant 0 : index
    %26 = vector.load %arg8[%c0_13, %c0_14] : memref<8x512xf32, #tpu.memory_space<vmem>>, vector<8x512xf32>
    tpu.vector_store %arg8[%c0_13, %c0_14], %25 {strides = array<i32>} : memref<8x512xf32, #tpu.memory_space<vmem>>, vector<8x512xf32>,
    return
  }
  func.func @transform_0(%arg0: i32, %arg1: i32) -> (i32, i32) {
    %c0_i32 = arith.constant 0 : i32
    %c0_i32_0 = arith.constant 0 : i32
    return %c0_i32, %arg0 : i32, i32
  }
  func.func @transform_1(%arg0: i32, %arg1: i32) -> (i32, i32) {
    %c0_i32 = arith.constant 0 : i32
    %c0_i32_0 = arith.constant 0 : i32
    return %c0_i32, %arg0 : i32, i32
  }
  func.func @transform_2(%arg0: i32, %arg1: i32) -> (i32, i32) {
    %c0_i32 = arith.constant 0 : i32
    %c0_i32_0 = arith.constant 0 : i32
    return %c0_i32, %arg0 : i32, i32
  }
  func.func @transform_3(%arg0: i32, %arg1: i32) -> (i32, i32) {
    %c0_i32 = arith.constant 0 : i32
    return %arg1, %arg0 : i32, i32
  }
  func.func @transform_4(%arg0: i32, %arg1: i32) -> (i32, i32) {
    %c0_i32 = arith.constant 0 : i32
    return %arg1, %arg0 : i32, i32
  }
  func.func @transform_5(%arg0: i32, %arg1: i32) -> (i32, i32) {
    %c0_i32 = arith.constant 0 : i32
    return %arg1, %arg0 : i32, i32
  }
  func.func @transform_6(%arg0: i32, %arg1: i32) -> (i32, i32) {
    %c0_i32 = arith.constant 0 : i32
    return %arg1, %arg0 : i32, i32
  }
}

</mosaic_0001>

<llo_original>
// kernel: tpu_custom_call.1
$region0: #{tpu_custom_call.1}
  #allocation0 [shape = 'u32[]', space=smem, size = 0x4, offset = 0x4, fixed_abs, tag = 'smem constant byte address 0x4 - core index']
  #allocation1 [shape = 'u32[144,128]{1,0:T(1,128)}', space=vmem, size = 0x12000, scoped, tag = 'internal scratch']
  %s0 = inlined_call_operand.hbm [shape: f32[1,512], index: 0, kind: input, shape index: {}]
  %s1 = inlined_call_operand.hbm [shape: f32[1,512], index: 1, kind: input, shape index: {}]
  %s2 = inlined_call_operand.vmem [shape: f32[1,512], index: 2, kind: input, shape index: {}]
  %s3 = inlined_call_operand.hbm [shape: f32[8,512], index: 3, kind: input, shape index: {}]
  %s4 = inlined_call_operand.hbm [shape: f32[8,512], index: 4, kind: input, shape index: {}]
  %s5 = inlined_call_operand.hbm [shape: f32[8,512], index: 5, kind: output, shape index: {0}]
  %s6 = inlined_call_operand.hbm [shape: f32[8,512], index: 6, kind: output, shape index: {1}]
  %7 = xla_tuple %s5, %s6
  %s8 = sld [smem:[#allocation0]]
  $region54: #{tpu_custom_call.1} parent=0
    _
  %s10 = ssub.s32 1, %s8
  %s11 = scalar_select 0, %s10, %s8
  $region1: #{tpu_custom_call.1} parent=0
    #allocation2 [shape = 'u8[2048]{0}', space=vmem, size = 0x800, scoped, tag = 'input window, operand 0, single buffered']
    #allocation3 [shape = 's32[1]{0}', space=sflag, size = 0x4, scoped, tag = 'scoped memory for tpu_custom_call.1']
    #allocation4 [shape = 's32[1]{0}', space=sflag, size = 0x4, scoped, tag = 'scoped memory for tpu_custom_call.1']
    #allocation5 [shape = 'u8[2048]{0}', space=vmem, size = 0x800, scoped, tag = 'input window, operand 1, single buffered']
    #allocation6 [shape = 's32[1]{0}', space=sflag, size = 0x4, scoped, tag = 'scoped memory for tpu_custom_call.1']
    #allocation7 [shape = 'u8[16384]{0}', space=vmem, size = 0x4000, scoped, tag = 'input window, operand 3, single buffered']
    #allocation8 [shape = 'u8[16384]{0}', space=vmem, size = 0x4000, scoped, tag = 'input window, operand 4, single buffered']
    #allocation9 [shape = 's32[1]{0}', space=sflag, size = 0x4, scoped, tag = 'scoped memory for tpu_custom_call.1']
    #allocation10 [shape = 'u8[16384]{0}', space=vmem, size = 0x4000, scoped, tag = 'output window, operand 0, single buffered']
    #allocation11 [shape = 'u8[16384]{0}', space=vmem, size = 0x4000, scoped, tag = 'output window, operand 1, single buffered']
    #allocation12 [shape = 's32[1]{0}', space=sflag, size = 0x4, scoped, tag = 'scoped memory for tpu_custom_call.1']
    %12 = vsyncpa [#allocation3], 0
    %13 = vsyncpa [#allocation6], 0
    %14 = vsyncpa [#allocation9], 0
    %15 = vsyncpa [#allocation4], 0
    %16 = vsyncpa [#allocation12], 0
    // Predicated region
    $region2: #{tpu_custom_call.1} parent=1 // pred_check
      _
    $region3: #{tpu_custom_call.1} parent=1 // pred_check_branch
      %18 = sbr.rel (0) target = $region5
    $region4: #{tpu_custom_call.1} parent=1 // pred_region
      %s20 = ssub.s32 64, 64
      %21 = vsyncadd [#allocation3], %s20
      %s23 = sshll.u32 [#allocation2], 4
      %s24 = int_to_ptr.vmem [resolvable:$true] %s23
      %26 = dma.hbm_to_vmem [thread:$0]  %s0, 64, %s24, [#allocation3]
    $region5: #{tpu_custom_call.1} parent=1 // pred_fallthru
      _
    // Predicated region
    $region6: #{tpu_custom_call.1} parent=1 // pred_check
      _
    $region7: #{tpu_custom_call.1} parent=1 // pred_check_branch
      %28 = sbr.rel (0) target = $region9
    $region8: #{tpu_custom_call.1} parent=1 // pred_region
      %s30 = ssub.s32 64, 64
      %31 = vsyncadd [#allocation6], %s30
      %s33 = sshll.u32 [#allocation5], 4
      %s34 = int_to_ptr.vmem [resolvable:$true] %s33
      %36 = dma.hbm_to_vmem [thread:$0]  %s1, 64, %s34, [#allocation6]
    $region9: #{tpu_custom_call.1} parent=1 // pred_fallthru
      _
    // Predicated region
    $region10: #{tpu_custom_call.1} parent=1 // pred_check
      _
    $region11: #{tpu_custom_call.1} parent=1 // pred_check_branch
      %38 = sbr.rel (0) target = $region13
    $region12: #{tpu_custom_call.1} parent=1 // pred_region
      _
    $region13: #{tpu_custom_call.1} parent=1 // pred_fallthru
      _
    // Predicated region
    $region14: #{tpu_custom_call.1} parent=1 // pred_check
      _
    $region15: #{tpu_custom_call.1} parent=1 // pred_check_branch
      %40 = sbr.rel (0) target = $region17
    $region16: #{tpu_custom_call.1} parent=1 // pred_region
      %s42 = ssub.s32 512, 512
      %43 = vsyncadd [#allocation6], %s42
      %s45 = sshll.u32 [#allocation7], 4
      %s46 = int_to_ptr.vmem [resolvable:$true] %s45
      %48 = dma.hbm_to_vmem [thread:$0]  %s3, 512, %s46, [#allocation6]
    $region17: #{tpu_custom_call.1} parent=1 // pred_fallthru
      _
    // Predicated region
    $region18: #{tpu_custom_call.1} parent=1 // pred_check
      _
    $region19: #{tpu_custom_call.1} parent=1 // pred_check_branch
      %50 = sbr.rel (0) target = $region21
    $region20: #{tpu_custom_call.1} parent=1 // pred_region
      %s52 = ssub.s32 512, 512
      %53 = vsyncadd [#allocation9], %s52
      %s55 = sshll.u32 [#allocation8], 4
      %s56 = int_to_ptr.vmem [resolvable:$true] %s55
      %58 = dma.hbm_to_vmem [thread:$0]  %s4, 512, %s56, [#allocation9]
    $region21: #{tpu_custom_call.1} parent=1 // pred_fallthru
      _
    // Predicated region
    $region22: #{tpu_custom_call.1} parent=1 // pred_check
      _
    $region23: #{tpu_custom_call.1} parent=1 // pred_check_branch
      %60 = sbr.rel (0) target = $region25
    $region24: #{tpu_custom_call.1} parent=1 // pred_region
      %61 = dma.done [#allocation3], 64
    $region25: #{tpu_custom_call.1} parent=1 // pred_fallthru
      _
    // Predicated region
    $region26: #{tpu_custom_call.1} parent=1 // pred_check
      _
    $region27: #{tpu_custom_call.1} parent=1 // pred_check_branch
      %63 = sbr.rel (0) target = $region29
    $region28: #{tpu_custom_call.1} parent=1 // pred_region
      %64 = dma.done [#allocation6], 64
    $region29: #{tpu_custom_call.1} parent=1 // pred_fallthru
      _
    // Predicated region
    $region30: #{tpu_custom_call.1} parent=1 // pred_check
      _
    $region31: #{tpu_custom_call.1} parent=1 // pred_check_branch
      %66 = sbr.rel (0) target = $region33
    $region32: #{tpu_custom_call.1} parent=1 // pred_region
      %67 = dma.done [#allocation6], 512
    $region33: #{tpu_custom_call.1} parent=1 // pred_fallthru
      _
    // Predicated region
    $region34: #{tpu_custom_call.1} parent=1 // pred_check
      _
    $region35: #{tpu_custom_call.1} parent=1 // pred_check_branch
      %69 = sbr.rel (0) target = $region37
    $region36: #{tpu_custom_call.1} parent=1 // pred_region
      %70 = dma.done [#allocation9], 512
    $region37: #{tpu_custom_call.1} parent=1 // pred_fallthru
      _
    %v71 = vld [vmem:[#allocation2] sm:$0xf]
    %v72 = vld [vmem:[#allocation5] sm:$0xf]
    %v73 = vld [vmem:[%s2] sm:$0xf]
    %v74 = vld [vmem:[#allocation7] sm:$0xff]
    %v75 = vld [vmem:[#allocation7 + $0x8] sm:$0xff]
    %v76 = vld [vmem:[#allocation7 + $0x10] sm:$0xff]
    %v77 = vld [vmem:[#allocation7 + $0x18] sm:$0xff]
    %78 = vrot.lane.b32.xlu0 %v74, 16
    %v79 = vpop.permute.xlu0 %78
    %80 = vrot.lane.b32.xlu0 %v75, 16
    %v81 = vpop.permute.xlu0 %80
    %82 = vrot.lane.b32.xlu0 %v76, 16
    %v83 = vpop.permute.xlu0 %82
    %84 = vrot.lane.b32.xlu0 %v77, 16
    %v85 = vpop.permute.xlu0 %84
    %v86 = vlaneseq
    %v87 = vand.u32 %v86, 127
    %vm88 = vcmp.lt.s32.totalorder %v87, 16
    %v89 = vsel %vm88, %v83, %v85
    %v90 = vsel %vm88, %v81, %v83
    %v91 = vsel %vm88, %v79, %v81
    %v92 = vsel %vm88, %v85, %v79
    %93 = vrot.lane.b32.xlu0 %v74, 112
    %v94 = vpop.permute.xlu0 %93
    %95 = vrot.lane.b32.xlu0 %v75, 112
    %v96 = vpop.permute.xlu0 %95
    %97 = vrot.lane.b32.xlu0 %v76, 112
    %v98 = vpop.permute.xlu0 %97
    %99 = vrot.lane.b32.xlu0 %v77, 112
    %v100 = vpop.permute.xlu0 %99
    %vm101 = vcmp.lt.s32.totalorder %v87, 112
    %v102 = vsel %vm101, %v98, %v100
    %v103 = vsel %vm101, %v96, %v98
    %v104 = vsel %vm101, %v94, %v96
    %v105 = vsel %vm101, %v100, %v94
    %v107 = vlaneseq
    %v108 = vshrl.u32 %v107, 7
    %v109 = vsub.s32 0, %v108
    %v110 = vrot.slane %v71, %v109
    %v111 = vlaneseq
    %v112 = vshrl.u32 %v111, 7
    %v113 = vsub.s32 1, %v112
    %v114 = vrot.slane %v71, %v113
    %v115 = vlaneseq
    %v116 = vshrl.u32 %v115, 7
    %v117 = vsub.s32 2, %v116
    %v118 = vrot.slane %v71, %v117
    %v119 = vlaneseq
    %v120 = vshrl.u32 %v119, 7
    %v121 = vsub.s32 3, %v120
    %v122 = vrot.slane %v71, %v121
    %v127 = vmul.f32 %v74, %v110
    %v128 = vmul.f32 %v75, %v114
    %v129 = vmul.f32 %v76, %v118
    %v130 = vmul.f32 %v77, %v122
    %v132 = vlaneseq
    %v133 = vshrl.u32 %v132, 7
    %v134 = vsub.s32 0, %v133
    %v135 = vrot.slane %v72, %v134
    %v136 = vlaneseq
    %v137 = vshrl.u32 %v136, 7
    %v138 = vsub.s32 1, %v137
    %v139 = vrot.slane %v72, %v138
    %v140 = vlaneseq
    %v141 = vshrl.u32 %v140, 7
    %v142 = vsub.s32 2, %v141
    %v143 = vrot.slane %v72, %v142
    %v144 = vlaneseq
    %v145 = vshrl.u32 %v144, 7
    %v146 = vsub.s32 3, %v145
    %v147 = vrot.slane %v72, %v146
    %v152 = vmul.f32 %v92, %v135
    %v153 = vmul.f32 %v91, %v139
    %v154 = vmul.f32 %v90, %v143
    %v155 = vmul.f32 %v89, %v147
    %v156 = vadd.f32 %v127, %v152
    %v157 = vadd.f32 %v128, %v153
    %v158 = vadd.f32 %v129, %v154
    %v159 = vadd.f32 %v130, %v155
    %v161 = vlaneseq
    %v162 = vshrl.u32 %v161, 7
    %v163 = vsub.s32 0, %v162
    %v164 = vrot.slane %v73, %v163
    %v165 = vlaneseq
    %v166 = vshrl.u32 %v165, 7
    %v167 = vsub.s32 1, %v166
    %v168 = vrot.slane %v73, %v167
    %v169 = vlaneseq
    %v170 = vshrl.u32 %v169, 7
    %v171 = vsub.s32 2, %v170
    %v172 = vrot.slane %v73, %v171
    %v173 = vlaneseq
    %v174 = vshrl.u32 %v173, 7
    %v175 = vsub.s32 3, %v174
    %v176 = vrot.slane %v73, %v175
    %v181 = vmul.f32 %v104, %v164
    %v182 = vmul.f32 %v103, %v168
    %v183 = vmul.f32 %v102, %v172
    %v184 = vmul.f32 %v105, %v176
    %v185 = vadd.f32 %v156, %v181
    %v186 = vadd.f32 %v157, %v182
    %v187 = vadd.f32 %v158, %v183
    %v188 = vadd.f32 %v159, %v184
    %189 = vst [vmem:[#allocation10] sm:$0xff] %v185
    %190 = vst [vmem:[#allocation10 + $0x8] sm:$0xff] %v186
    %191 = vst [vmem:[#allocation10 + $0x10] sm:$0xff] %v187
    %192 = vst [vmem:[#allocation10 + $0x18] sm:$0xff] %v188
    %v193 = vld [vmem:[#allocation8] sm:$0xff]
    %v194 = vld [vmem:[#allocation8 + $0x8] sm:$0xff]
    %v195 = vld [vmem:[#allocation8 + $0x10] sm:$0xff]
    %v196 = vld [vmem:[#allocation8 + $0x18] sm:$0xff]
    %197 = vrot.lane.b32.xlu0 %v193, 16
    %v198 = vpop.permute.xlu0 %197
    %199 = vrot.lane.b32.xlu0 %v194, 16
    %v200 = vpop.permute.xlu0 %199
    %201 = vrot.lane.b32.xlu0 %v195, 16
    %v202 = vpop.permute.xlu0 %201
    %203 = vrot.lane.b32.xlu0 %v196, 16
    %v204 = vpop.permute.xlu0 %203
    %v205 = vsel %vm88, %v202, %v204
    %v206 = vsel %vm88, %v200, %v202
    %v207 = vsel %vm88, %v198, %v200
    %v208 = vsel %vm88, %v204, %v198
    %209 = vrot.lane.b32.xlu0 %v193, 112
    %v210 = vpop.permute.xlu0 %209
    %211 = vrot.lane.b32.xlu0 %v194, 112
    %v212 = vpop.permute.xlu0 %211
    %213 = vrot.lane.b32.xlu0 %v195, 112
    %v214 = vpop.permute.xlu0 %213
    %215 = vrot.lane.b32.xlu0 %v196, 112
    %v216 = vpop.permute.xlu0 %215
    %v217 = vsel %vm101, %v214, %v216
    %v218 = vsel %vm101, %v212, %v214
    %v219 = vsel %vm101, %v210, %v212
    %v220 = vsel %vm101, %v216, %v210
    %v221 = vmul.f32 %v193, %v110
    %v222 = vmul.f32 %v194, %v114
    %v223 = vmul.f32 %v195, %v118
    %v224 = vmul.f32 %v196, %v122
    %v225 = vmul.f32 %v208, %v135
    %v226 = vmul.f32 %v207, %v139
    %v227 = vmul.f32 %v206, %v143
    %v228 = vmul.f32 %v205, %v147
    %v229 = vadd.f32 %v221, %v225
    %v230 = vadd.f32 %v222, %v226
    %v231 = vadd.f32 %v223, %v227
    %v232 = vadd.f32 %v224, %v228
    %v233 = vmul.f32 %v219, %v164
    %v234 = vmul.f32 %v218, %v168
    %v235 = vmul.f32 %v217, %v172
    %v236 = vmul.f32 %v220, %v176
    %v237 = vadd.f32 %v229, %v233
    %v238 = vadd.f32 %v230, %v234
    %v239 = vadd.f32 %v231, %v235
    %v240 = vadd.f32 %v232, %v236
    %241 = vst [vmem:[#allocation11] sm:$0xff] %v237
    %242 = vst [vmem:[#allocation11 + $0x8] sm:$0xff] %v238
    %243 = vst [vmem:[#allocation11 + $0x10] sm:$0xff] %v239
    %244 = vst [vmem:[#allocation11 + $0x18] sm:$0xff] %v240
    // Predicated region
    $region38: #{tpu_custom_call.1} parent=1 // pred_check
      _
    $region39: #{tpu_custom_call.1} parent=1 // pred_check_branch
      %246 = sbr.rel (0) target = $region41
    $region40: #{tpu_custom_call.1} parent=1 // pred_region
      %s248 = ssub.s32 512, 512
      %249 = vsyncadd [#allocation4], %s248
      %s251 = sshll.u32 [#allocation10], 4
      %s252 = int_to_ptr.vmem [resolvable:$true] %s251
      %254 = dma.vmem_to_hbm [thread:$0]  %s252, 512, %s5, [#allocation4]
    $region41: #{tpu_custom_call.1} parent=1 // pred_fallthru
      _
    // Predicated region
    $region42: #{tpu_custom_call.1} parent=1 // pred_check
      _
    $region43: #{tpu_custom_call.1} parent=1 // pred_check_branch
      %256 = sbr.rel (0) target = $region45
    $region44: #{tpu_custom_call.1} parent=1 // pred_region
      %s258 = ssub.s32 512, 512
      %259 = vsyncadd [#allocation12], %s258
      %s261 = sshll.u32 [#allocation11], 4
      %s262 = int_to_ptr.vmem [resolvable:$true] %s261
      %264 = dma.vmem_to_hbm [thread:$0]  %s262, 512, %s6, [#allocation12]
    $region45: #{tpu_custom_call.1} parent=1 // pred_fallthru
      _
    // Predicated region
    $region46: #{tpu_custom_call.1} parent=1 // pred_check
      _
    $region47: #{tpu_custom_call.1} parent=1 // pred_check_branch
      %266 = sbr.rel (0) target = $region49
    $region48: #{tpu_custom_call.1} parent=1 // pred_region
      %267 = dma.done [#allocation4], 512
    $region49: #{tpu_custom_call.1} parent=1 // pred_fallthru
      _
    // Predicated region
    $region50: #{tpu_custom_call.1} parent=1 // pred_check
      _
    $region51: #{tpu_custom_call.1} parent=1 // pred_check_branch
      %269 = sbr.rel (0) target = $region53
    $region52: #{tpu_custom_call.1} parent=1 // pred_region
      %270 = dma.done [#allocation12], 512
    $region53: #{tpu_custom_call.1} parent=1 // pred_fallthru
      _
    %271 = vsyncpa [#allocation3], 1
    %272 = vsyncpa [#allocation6], 1
    %273 = vsyncpa [#allocation9], 1
    %274 = vsyncpa [#allocation4], 1
    %275 = vsyncpa [#allocation12], 1

</llo_original>
